<compile_context>
chip_gen: v7x
topology: tpu7x:2x2x1
jax: 0.10.0
libtpu: 0.0.40
codegen_flags: <defaults>
</compile_context>

<pallas_src>
import functools

import jax
import jax.numpy as jnp
from jax import lax
from jax.experimental import pallas as pl
from jax.experimental.pallas import tpu as pltpu

ALPHA = 0.25
GAMMA = 2.0


def _focal_kernel(logits_ref, target_ref, out_ref, acc_ref, *,
                  alpha, gamma, n_rows, tile_n, mask_tail):
    i = pl.program_id(0)

    @pl.when(i == 0)
    def _init():
        acc_ref[...] = jnp.zeros_like(acc_ref)

    x = logits_ref[...].astype(jnp.float32)       # (tile_n, C) native dtype -> f32
    t = target_ref[...]                           # (tile_n, 1) int32

    if mask_tail:
        # Mask rows of the (possibly partial) last block: padded rows read
        # garbage, so zero x and force an impossible class id.
        local = lax.broadcasted_iota(jnp.int32, (tile_n, 1), 0)
        valid = (i * tile_n + local) < n_rows     # (tile_n, 1) bool
        x = jnp.where(valid, x, 0.0)
        t = jnp.where(valid, t, -1)

    # Select the target logit per row: one lane compare + lane reduce (XLU),
    # so only (tile_n, 1) values go through exp/pow instead of (tile_n, C).
    class_ids = lax.broadcasted_iota(jnp.int32, x.shape, 1)
    x_t = jnp.sum(jnp.where(class_ids == t, x, 0.0), axis=-1, keepdims=True)

    p = jnp.exp(x_t)
    base = 1.0 - p
    if float(gamma).is_integer():
        mod = lax.integer_pow(base, int(gamma))   # matches torch pow for integral gamma
    else:
        mod = base ** gamma                       # NaN for x_t > 0, same as reference
    row_loss = (-alpha) * x_t * mod               # (tile_n, 1)

    # Vector accumulation; full reduce only once at the end.
    acc_ref[...] += row_loss

    @pl.when(i == pl.num_programs(0) - 1)
    def _finalize():
        out_ref[...] = jnp.sum(acc_ref[...], axis=0, keepdims=True)


def focal_loss(logits, target, *, alpha=ALPHA, gamma=GAMMA, tile_n=None):
    """logits: (N, C) float (f32 or bf16), target: (N,) int -> scalar float32."""
    N, C = logits.shape
    itemsize = jnp.dtype(logits.dtype).itemsize

    if tile_n is None:
        # Keep the logits block around <= 2 MiB so 2 inputs x 2 buffers + the
        # accumulator stay well under the scoped VMEM limit on v5e/v6e/v7x.
        by_vmem = max(8, (2 * 1024 * 1024) // max(1, C * itemsize))
        tile_n = min(1024, by_vmem)
    tile_n = max(8, (int(tile_n) // 8) * 8)       # sublane multiple
    n_pad8 = ((N + 7) // 8) * 8
    tile_n = min(tile_n, n_pad8)                  # don't exceed (padded) row count

    grid_n = pl.cdiv(N, tile_n)
    mask_tail = (N % tile_n) != 0

    target2d = target.astype(jnp.int32).reshape(N, 1)

    kernel = functools.partial(
        _focal_kernel, alpha=float(alpha), gamma=float(gamma),
        n_rows=N, tile_n=tile_n, mask_tail=mask_tail)

    out = pl.pallas_call(
        kernel,
        out_shape=jax.ShapeDtypeStruct((1, 1), jnp.float32),
        grid_spec=pltpu.PrefetchScalarGridSpec(
            num_scalar_prefetch=0,
            grid=(grid_n,),
            in_specs=[
                pl.BlockSpec((tile_n, C), lambda i: (i, 0)),
                pl.BlockSpec((tile_n, 1), lambda i: (i, 0)),
            ],
            out_specs=pl.BlockSpec((1, 1), lambda i: (0, 0)),
            scratch_shapes=[pltpu.VMEM((tile_n, 1), jnp.float32)],
        ),
        compiler_params=pltpu.CompilerParams(
            # Reduction axis: accumulator/output are resident across it.
            dimension_semantics=("arbitrary",),
            vmem_limit_bytes=32 * 1024 * 1024,
        ),
    )(logits, target2d)
    return out[0, 0]


def _reference(logits, target, alpha=ALPHA, gamma=GAMMA):
    C = logits.shape[-1]
    y = jax.nn.one_hot(target, C, dtype=jnp.float32)
    x = logits.astype(jnp.float32)
    p = jnp.exp(x)
    loss = -1.0 * y * x * alpha * (1.0 - p) ** int(gamma)
    return jnp.sum(loss)


if __name__ == "__main__":
    key = jax.random.PRNGKey(0)
    k1, k2 = jax.random.split(key)

    N, C = 16, 32  # small: batch of 16 samples, 32 classes
    logits = jax.random.normal(k1, (N, C), dtype=jnp.float32)
    target = jax.random.randint(k2, (N,), 0, C, dtype=jnp.int32)

    out = focal_loss(logits, target)
    out = jax.block_until_ready(out)

    ref = _reference(logits, target)
    assert jnp.allclose(out, ref, rtol=1e-5, atol=1e-5), (out, ref)

    print("KERNEL_OK")
</pallas_src>

<mosaic_0001>
module attributes {stable_mosaic.version = 11 : i64} {
  func.func @_focal_kernel(%arg0: i32, %arg1: memref<16x32xf32, #tpu.memory_space<vmem>>, %arg2: memref<16x1xi32, #tpu.memory_space<vmem>>, %arg3: memref<1x1xf32, #tpu.memory_space<vmem>>, %arg4: memref<16x1xf32, #tpu.memory_space<vmem>>) attributes {dimension_semantics = [#tpu.dimension_semantics<arbitrary>], iteration_bounds = array<i64: 1>, scalar_prefetch = 0 : i64, scratch_operands = 1 : i64, tpu.core_type = #tpu.core_type<tc>, window_params = [{transform_indices = @transform_0, window_bounds = array<i64: 16, 32>}, {transform_indices = @transform_1, window_bounds = array<i64: 16, 1>}, {pipeline_mode = #tpu.pipeline_mode<synchronous>, transform_indices = @transform_2, window_bounds = array<i64: 1, 1>}]} {
    %c0_i32 = arith.constant 0 : i32
    %0 = arith.cmpi eq, %arg0, %c0_i32 : i32
    %1 = arith.extui %0 : i1 to i32
    %c0_i32_0 = arith.constant 0 : i32
    %2 = arith.cmpi ne, %1, %c0_i32_0 : i32
    scf.if %2 {
      %cst_13 = arith.constant 0.000000e+00 : f32
      %25 = vector.broadcast %cst_13 : f32 to vector<16x1xf32>
      %c0_14 = arith.constant 0 : index
      %c0_15 = arith.constant 0 : index
      %26 = vector.load %arg4[%c0_14, %c0_15] : memref<16x1xf32, #tpu.memory_space<vmem>>, vector<16x1xf32>
      tpu.vector_store %arg4[%c0_14, %c0_15], %25 {strides = array<i32>} : memref<16x1xf32, #tpu.memory_space<vmem>>, vector<16x1xf32>,
    } else {
    }
    %c0 = arith.constant 0 : index
    %c0_1 = arith.constant 0 : index
    %3 = vector.load %arg1[%c0, %c0_1] : memref<16x32xf32, #tpu.memory_space<vmem>>, vector<16x32xf32>
    %c0_2 = arith.constant 0 : index
    %c0_3 = arith.constant 0 : index
    %4 = vector.load %arg2[%c0_2, %c0_3] : memref<16x1xi32, #tpu.memory_space<vmem>>, vector<16x1xi32>
    %5 = tpu.iota {dimensions = array<i32: 1>} : vector<16x32xi32>
    %6 = vector.broadcast %4 : vector<16x1xi32> to vector<16x32xi32>
    %7 = arith.cmpi eq, %5, %6 : vector<16x32xi32>
    %cst = arith.constant 0.000000e+00 : f32
    %8 = vector.broadcast %cst : f32 to vector<16x32xf32>
    %9 = arith.select %7, %3, %8 : vector<16x32xi1>, vector<16x32xf32>
    %cst_4 = arith.constant dense<0.000000e+00> : vector<16xf32>
    %10 = vector.multi_reduction <add>, %9, %cst_4 [1] : vector<16x32xf32> to vector<16xf32>
    %11 = vector.shape_cast %10 : vector<16xf32> to vector<16x1xf32>
    %12 = math.exp %11 : vector<16x1xf32>
    %cst_5 = arith.constant 1.000000e+00 : f32
    %13 = vector.broadcast %cst_5 : f32 to vector<16x1xf32>
    %14 = arith.subf %13, %12 : vector<16x1xf32>
    %15 = arith.mulf %14, %14 : vector<16x1xf32>
    %cst_6 = arith.constant -2.500000e-01 : f32
    %16 = vector.broadcast %cst_6 : f32 to vector<16x1xf32>
    %17 = arith.mulf %16, %11 : vector<16x1xf32>
    %18 = arith.mulf %17, %15 : vector<16x1xf32>
    %c0_7 = arith.constant 0 : index
    %c0_8 = arith.constant 0 : index
    %19 = vector.load %arg4[%c0_7, %c0_8] : memref<16x1xf32, #tpu.memory_space<vmem>>, vector<16x1xf32>
    %20 = arith.addf %19, %18 : vector<16x1xf32>
    %c0_9 = arith.constant 0 : index
    %c0_10 = arith.constant 0 : index
    %21 = vector.load %arg4[%c0_9, %c0_10] : memref<16x1xf32, #tpu.memory_space<vmem>>, vector<16x1xf32>
    tpu.vector_store %arg4[%c0_9, %c0_10], %20 {strides = array<i32>} : memref<16x1xf32, #tpu.memory_space<vmem>>, vector<16x1xf32>,
    %c0_i32_11 = arith.constant 0 : i32
    %22 = arith.cmpi eq, %arg0, %c0_i32_11 : i32
    %23 = arith.extui %22 : i1 to i32
    %c0_i32_12 = arith.constant 0 : i32
    %24 = arith.cmpi ne, %23, %c0_i32_12 : i32
    scf.if %24 {
      %c0_13 = arith.constant 0 : index
      %c0_14 = arith.constant 0 : index
      %25 = vector.load %arg4[%c0_13, %c0_14] : memref<16x1xf32, #tpu.memory_space<vmem>>, vector<16x1xf32>
      %cst_15 = arith.constant dense<0.000000e+00> : vector<1xf32>
      %26 = vector.multi_reduction <add>, %25, %cst_15 [0] : vector<16x1xf32> to vector<1xf32>
      %27 = vector.shape_cast %26 : vector<1xf32> to vector<1x1xf32>
      %c0_16 = arith.constant 0 : index
      %c0_17 = arith.constant 0 : index
      %28 = vector.load %arg3[%c0_16, %c0_17] : memref<1x1xf32, #tpu.memory_space<vmem>>, vector<1x1xf32>
      tpu.vector_store %arg3[%c0_16, %c0_17], %27 {strides = array<i32>} : memref<1x1xf32, #tpu.memory_space<vmem>>, vector<1x1xf32>,
    } else {
    }
    return
  }
  func.func @transform_0(%arg0: i32) -> (i32, i32) {
    %c0_i32 = arith.constant 0 : i32
    %c0_i32_0 = arith.constant 0 : i32
    return %arg0, %c0_i32 : i32, i32
  }
  func.func @transform_1(%arg0: i32) -> (i32, i32) {
    %c0_i32 = arith.constant 0 : i32
    %c0_i32_0 = arith.constant 0 : i32
    return %arg0, %c0_i32 : i32, i32
  }
  func.func @transform_2(%arg0: i32) -> (i32, i32) {
    %c0_i32 = arith.constant 0 : i32
    %c0_i32_0 = arith.constant 0 : i32
    %c0_i32_1 = arith.constant 0 : i32
    return %c0_i32, %c0_i32_0 : i32, i32
  }
}

</mosaic_0001>

<llo_original>
// kernel: tpu_custom_call.1
$region0: #{tpu_custom_call.1}
  #allocation0 [shape = 'u32[]', space=smem, size = 0x4, offset = 0x4, fixed_abs, tag = 'smem constant byte address 0x4 - core index']
  #allocation1 [shape = 'u32[144,128]{1,0:T(1,128)}', space=vmem, size = 0x12000, scoped, tag = 'internal scratch']
  #allocation2 [shape = 'f32[16,1]{1,0:T(8,128)}', space=vmem, size = 0x2000, scoped, tag = 'scratch operand']
  %s0 = inlined_call_operand.vmem [shape: f32[16,32], index: 0, kind: input, shape index: {}]
  %s1 = inlined_call_operand.vmem [shape: s32[16,1], index: 1, kind: input, shape index: {}]
  %s2 = inlined_call_operand.hbm [shape: f32[1,1], index: 2, kind: output, shape index: {}]
  %s3 = sld [smem:[#allocation0]]
  $region26: #{tpu_custom_call.1} parent=0
    _
  %s5 = ssub.s32 1, %s3
  %s6 = scalar_select 0, %s5, %s3
  $region1: #{tpu_custom_call.1} parent=0
    #allocation3 [shape = 'u8[512]{0}', space=vmem, size = 0x400, scoped, tag = 'output window, operand 0, single buffered']
    #allocation4 [shape = 's32[1]{0}', space=sflag, size = 0x4, scoped, tag = 'scoped memory for tpu_custom_call.1']
    %7 = vsyncpa [#allocation4], 0
    // Predicated region
    $region2: #{tpu_custom_call.1} parent=1 // pred_check
      _
    $region3: #{tpu_custom_call.1} parent=1 // pred_check_branch
      %9 = sbr.rel (0) target = $region5
    $region4: #{tpu_custom_call.1} parent=1 // pred_region
      _
    $region5: #{tpu_custom_call.1} parent=1 // pred_fallthru
      _
    // Predicated region
    $region6: #{tpu_custom_call.1} parent=1 // pred_check
      _
    $region7: #{tpu_custom_call.1} parent=1 // pred_check_branch
      %11 = sbr.rel (0) target = $region9
    $region8: #{tpu_custom_call.1} parent=1 // pred_region
      _
    $region9: #{tpu_custom_call.1} parent=1 // pred_fallthru
      _
    %p12 = scmp.eq.s32.totalorder 0, 0
    // Predicated region
    $region10: #{tpu_custom_call.1} parent=1 // pred_check
      %p13 = pneg %p12
    $region11: #{tpu_custom_call.1} parent=1 // pred_check_branch
      %15 = sbr.rel (%p13) target = $region13
    $region12: #{tpu_custom_call.1} parent=1 // pred_region
      %vm16 = vcmask 7168
      %17 = vst.msk [vmem:[#allocation2] sm:$0xff] %vm16, 0.0
      %18 = vst.msk [vmem:[#allocation2 + $0x8] sm:$0xff] %vm16, 0.0
    $region13: #{tpu_custom_call.1} parent=1 // pred_fallthru
      _
    %v19 = vld [vmem:[%s0] sm:$0xff]
    %v20 = vld [vmem:[%s0 + $0x8] sm:$0xff]
    %v21 = vld [vmem:[%s1] sm:$0xff]
    %v22 = vld [vmem:[%s1 + $0x8] sm:$0xff]
    %v23 = vlaneseq
    %v24 = vand.u32 %v23, 127
    %25 = vset.pattern.permute.xlu0 0
    %26 = vperm.xlu0 %25, %v21
    %v27 = vpop.permute.xlu0 %26
    %28 = vset.pattern.permute.xlu0 0
    %29 = vperm.xlu0 %28, %v22
    %v30 = vpop.permute.xlu0 %29
    %vm31 = vcmp.eq.s32.totalorder %v24, %v27
    %vm32 = vcmp.eq.s32.totalorder %v24, %v30
    %v33 = vsel %vm31, %v19, 0.0
    %v34 = vsel %vm32, %v20, 0.0
    %vm35 = vcmask 261120
    %v36 = vsel %vm35, %v33, 0.0
    %37 = vadd.xlane.f32.xlu0 %v36
    %v38 = vpop.xlane.xlu0 %37
    %v39 = vsel %vm35, %v34, 0.0
    %40 = vadd.xlane.f32.xlu0 %v39
    %v41 = vpop.xlane.xlu0 %40
    %v42 = vmul.f32 %v38, 1.442695
    %v43 = vpow.pop %v42
    %v44 = vmul.f32 %v41, 1.442695
    %v45 = vpow.pop %v44
    %v46 = vsub.f32 1.0, %v43
    %v47 = vsub.f32 1.0, %v45
    %v48 = vmul.f32 %v46, %v46
    %v49 = vmul.f32 %v47, %v47
    %v50 = vmul.f32 %v38, -0.25
    %v51 = vmul.f32 %v41, -0.25
    %v52 = vmul.f32 %v50, %v48
    %v53 = vmul.f32 %v51, %v49
    %v54 = vld [vmem:[#allocation2] sm:$0xff]
    %v55 = vld [vmem:[#allocation2 + $0x8] sm:$0xff]
    %v56 = vadd.f32 %v54, %v52
    %v57 = vadd.f32 %v55, %v53
    %vm58 = vcmask 7168
    %59 = vst.msk [vmem:[#allocation2] sm:$0xff] %vm58, %v56
    %60 = vst.msk [vmem:[#allocation2 + $0x8] sm:$0xff] %vm58, %v57
    // Predicated region
    $region14: #{tpu_custom_call.1} parent=1 // pred_check
      %p61 = pneg %p12
    $region15: #{tpu_custom_call.1} parent=1 // pred_check_branch
      %63 = sbr.rel (%p61) target = $region17
    $region16: #{tpu_custom_call.1} parent=1 // pred_region
      %v64 = vld [vmem:[#allocation2] sm:$0xff]
      %v65 = vld [vmem:[#allocation2 + $0x8] sm:$0xff]
      %v66 = vsel %vm58, %v64, 0.0
      %v67 = vsel %vm58, %v65, 0.0
      %v68 = vadd.f32 %v66, %v67
      %v69 = vrot.slane %v68, 4
      %v70 = vadd.f32 %v68, %v69
      %v71 = vrot.slane %v70, 2
      %v72 = vadd.f32 %v70, %v71
      %v73 = vrot.slane %v72, 1
      %v74 = vadd.f32 %v72, %v73
      %vm75 = vcmask 0
      %76 = vst.msk [vmem:[#allocation3] sm:$0x1] %vm75, %v74
    $region17: #{tpu_custom_call.1} parent=1 // pred_fallthru
      _
    // Predicated region
    $region18: #{tpu_custom_call.1} parent=1 // pred_check
      _
    $region19: #{tpu_custom_call.1} parent=1 // pred_check_branch
      %78 = sbr.rel (0) target = $region21
    $region20: #{tpu_custom_call.1} parent=1 // pred_region
      %s80 = ssub.s32 16, 16
      %81 = vsyncadd [#allocation4], %s80
      %s83 = sshll.u32 [#allocation3], 4
      %s84 = int_to_ptr.vmem [resolvable:$true] %s83
      %86 = dma.vmem_to_hbm [thread:$0]  %s84, 16, %s2, [#allocation4]
    $region21: #{tpu_custom_call.1} parent=1 // pred_fallthru
      _
    // Predicated region
    $region22: #{tpu_custom_call.1} parent=1 // pred_check
      _
    $region23: #{tpu_custom_call.1} parent=1 // pred_check_branch
      %88 = sbr.rel (0) target = $region25
    $region24: #{tpu_custom_call.1} parent=1 // pred_region
      %89 = dma.done [#allocation4], 16
    $region25: #{tpu_custom_call.1} parent=1 // pred_fallthru
      _
    %90 = vsyncpa [#allocation4], 1

</llo_original>
